<compile_context>
chip_gen: v6e
topology: v6e:2x2x1
jax: 0.10.0
libtpu: 0.0.40
codegen_flags: <defaults>
</compile_context>

<pallas_src>
import jax
import jax.numpy as jnp
from jax.experimental import pallas as pl
from jax.experimental.pallas import tpu as pltpu


def gcn_bin_kernel(a_ref, d_ref, x_ref, w1_ref, b1_ref, w3_ref, b3_ref,
                   w4_ref, b4_ref, out_ref):
    a = a_ref[...]        # [N, N] bf16: A + I (unnormalized), loaded once, reused 3x
    d = d_ref[...]        # [N, 1] f32:  deg^{-1/2}

    def propagate(h):
        # A_hat @ h == D^{-1/2} (A + I) (D^{-1/2} h): fold the normalization
        # into cheap row scalings of the narrow H (F <= 32) instead of scaling
        # the N x N adjacency.  bf16 x bf16 matmul, f32 accumulation.
        hs = (h * d).astype(jnp.bfloat16)
        t = jnp.dot(a, hs, preferred_element_type=jnp.float32)   # MXU
        return t * d

    # conv1: GCNConv(1 -> 32).  K=1 "matmul" == broadcast multiply (VPU only).
    h = x_ref[...] * w1_ref[...]                  # [N,1] * [1,32] -> [N,32]
    h = jnp.maximum(propagate(h) + b1_ref[...], 0.0)

    # conv3: GCNConv(32 -> 16)
    h = jnp.dot(h, w3_ref[...], preferred_element_type=jnp.float32)
    h = jnp.maximum(propagate(h) + b3_ref[...], 0.0)

    # conv4: GCNConv(16 -> num_bins+1) -- output padded to 128 lanes (dense vst)
    h = jnp.dot(h, w4_ref[...], preferred_element_type=jnp.float32)
    out_ref[...] = propagate(h) + b4_ref[...]


def _build_dense_graph(edge_index, num_nodes):
    """Dense self-looped adjacency (A + I) and deg^{-1/2}.

    Duplicate edges scatter-ADD (matching PyG GCNConv's scatter-add); the
    degree comes from an O(E) scatter-add over targets (+1 for the self loop),
    not an O(N^2) row-sum.
    """
    N = num_nodes
    src, dst = edge_index[0], edge_index[1]
    a = jnp.zeros((N, N), jnp.float32).at[dst, src].add(1.0)
    a = a + jnp.eye(N, dtype=jnp.float32)
    deg = jnp.zeros((N,), jnp.float32).at[dst].add(1.0) + 1.0   # self loop
    dinv_sqrt = jax.lax.rsqrt(deg)                              # deg >= 1 always
    return a, dinv_sqrt


def gcn_bin_forward(x, edge_index, params, num_nodes):
    """Forward pass matching GCN_Bin.forward(data) with data.x = x [N,1],
    data.edge_index = edge_index [2, E] (row 0 = source, row 1 = target)."""
    N = num_nodes
    w1, b1, w3, b3, w4, b4 = params
    out_dim = w4.shape[1]
    out_pad = -(-out_dim // 128) * 128   # lane-dense output slab (>=128)

    a, dinv_sqrt = _build_dense_graph(edge_index, N)

    # Pad the last layer to the lane-dense output width (zeros past out_dim).
    w4p = jnp.zeros((w4.shape[0], out_pad), jnp.float32).at[:, :out_dim].set(w4)
    b4p = jnp.zeros((1, out_pad), jnp.float32).at[:, :out_dim].set(b4)

    vmem_spec = pl.BlockSpec(memory_space=pltpu.MemorySpace.VMEM)

    out = pl.pallas_call(
        gcn_bin_kernel,
        out_shape=jax.ShapeDtypeStruct((N, out_pad), jnp.float32),
        in_specs=[vmem_spec] * 9,
        out_specs=vmem_spec,
        compiler_params=pltpu.CompilerParams(
            vmem_limit_bytes=32 * 1024 * 1024),
    )(
        a.astype(jnp.bfloat16),                    # A streamed in bf16
        dinv_sqrt[:, None].astype(jnp.float32),    # [N, 1]
        x.astype(jnp.float32),
        w1, b1[None, :],
        w3, b3[None, :],
        w4p, b4p,
    )
    return out[:, :out_dim]


def _glorot(key, fan_in, fan_out):
    lim = (6.0 / (fan_in + fan_out)) ** 0.5
    return jax.random.uniform(key, (fan_in, fan_out), jnp.float32, -lim, lim)


def _ref_forward(x, edge_index, params, num_nodes):
    """Pure-JAX f32 reference (explicit A_hat) for a tolerance check."""
    w1, b1, w3, b3, w4, b4 = params
    a, dinv_sqrt = _build_dense_graph(edge_index, num_nodes)
    a_hat = a * dinv_sqrt[:, None] * dinv_sqrt[None, :]
    h = jnp.maximum(a_hat @ (x @ w1) + b1, 0.0)
    h = jnp.maximum(a_hat @ (h @ w3) + b3, 0.0)
    return a_hat @ (h @ w4) + b4


if __name__ == "__main__":
    key = jax.random.PRNGKey(0)
    kx, k1, k3, k4 = jax.random.split(key, 4)

    N = 16            # number of graph nodes
    num_bins = 10     # module default -> output channels = num_bins + 1 = 11

    # Deterministic small undirected ring graph: edges i <-> (i+1) mod N.
    src = jnp.arange(N, dtype=jnp.int32)
    dst = (src + 1) % N
    edge_index = jnp.stack(
        [jnp.concatenate([src, dst]), jnp.concatenate([dst, src])], axis=0
    )  # [2, 2N]

    # data.x: one scalar feature per node -> [N, 1]
    x = jax.random.normal(kx, (N, 1), jnp.float32)

    # Deterministic synthetic parameters (glorot weights, zero biases —
    # matching PyG GCNConv's default bias init).
    w1 = _glorot(k1, 1, 32)
    b1 = jnp.zeros((32,), jnp.float32)
    w3 = _glorot(k3, 32, 16)
    b3 = jnp.zeros((16,), jnp.float32)
    w4 = _glorot(k4, 16, num_bins + 1)
    b4 = jnp.zeros((num_bins + 1,), jnp.float32)
    params = (w1, b1, w3, b3, w4, b4)

    out = gcn_bin_forward(x, edge_index, params, N)
    jax.block_until_ready(out)

    assert out.shape == (N, num_bins + 1)
    assert bool(jnp.all(jnp.isfinite(out)))

    # Tolerance check vs f32 reference (bf16 adjacency introduces small drift).
    ref = _ref_forward(x, edge_index, params, N)
    max_err = float(jnp.max(jnp.abs(out - ref)))
    assert max_err < 5e-2, f"max abs error {max_err} vs f32 reference"

    print("KERNEL_OK")
</pallas_src>

<mosaic_0001>
module attributes {stable_mosaic.version = 11 : i64} {
  func.func @gcn_bin_kernel(%arg0: memref<16x16xbf16, #tpu.memory_space<vmem>>, %arg1: memref<16x1xf32, #tpu.memory_space<vmem>>, %arg2: memref<16x1xf32, #tpu.memory_space<vmem>>, %arg3: memref<1x32xf32, #tpu.memory_space<vmem>>, %arg4: memref<1x32xf32, #tpu.memory_space<vmem>>, %arg5: memref<32x16xf32, #tpu.memory_space<vmem>>, %arg6: memref<1x16xf32, #tpu.memory_space<vmem>>, %arg7: memref<16x128xf32, #tpu.memory_space<vmem>>, %arg8: memref<1x128xf32, #tpu.memory_space<vmem>>, %arg9: memref<16x128xf32, #tpu.memory_space<vmem>>) attributes {dimension_semantics = [], scalar_prefetch = 0 : i64, scratch_operands = 0 : i64, tpu.core_type = #tpu.core_type<tc>} {
    %c0 = arith.constant 0 : index
    %c0_0 = arith.constant 0 : index
    %0 = vector.load %arg0[%c0, %c0_0] : memref<16x16xbf16, #tpu.memory_space<vmem>>, vector<16x16xbf16>
    %c0_1 = arith.constant 0 : index
    %c0_2 = arith.constant 0 : index
    %1 = vector.load %arg1[%c0_1, %c0_2] : memref<16x1xf32, #tpu.memory_space<vmem>>, vector<16x1xf32>
    %c0_3 = arith.constant 0 : index
    %c0_4 = arith.constant 0 : index
    %2 = vector.load %arg2[%c0_3, %c0_4] : memref<16x1xf32, #tpu.memory_space<vmem>>, vector<16x1xf32>
    %c0_5 = arith.constant 0 : index
    %c0_6 = arith.constant 0 : index
    %3 = vector.load %arg3[%c0_5, %c0_6] : memref<1x32xf32, #tpu.memory_space<vmem>>, vector<1x32xf32>
    %4 = vector.broadcast %2 : vector<16x1xf32> to vector<16x32xf32>
    %5 = vector.broadcast %3 : vector<1x32xf32> to vector<16x32xf32>
    %6 = arith.mulf %4, %5 : vector<16x32xf32>
    %7 = vector.broadcast %1 : vector<16x1xf32> to vector<16x32xf32>
    %8 = arith.mulf %6, %7 : vector<16x32xf32>
    %9 = arith.truncf %8 : vector<16x32xf32> to vector<16x32xbf16>
    %cst = arith.constant dense<0.000000e+00> : vector<16x32xf32>
    %10 = tpu.matmul %0, %9, %cst {dimension_numbers = #tpu.dot_dimension_numbers<[1], [0], [0], [1], [0, 0, 1, 1], [], []>} : vector<16x16xbf16>, vector<16x32xbf16>, vector<16x32xf32> -> vector<16x32xf32>
    %11 = vector.broadcast %1 : vector<16x1xf32> to vector<16x32xf32>
    %12 = arith.mulf %10, %11 : vector<16x32xf32>
    %c0_7 = arith.constant 0 : index
    %c0_8 = arith.constant 0 : index
    %13 = vector.load %arg4[%c0_7, %c0_8] : memref<1x32xf32, #tpu.memory_space<vmem>>, vector<1x32xf32>
    %14 = vector.broadcast %13 : vector<1x32xf32> to vector<16x32xf32>
    %15 = arith.addf %12, %14 : vector<16x32xf32>
    %cst_9 = arith.constant 0.000000e+00 : f32
    %16 = vector.broadcast %cst_9 : f32 to vector<16x32xf32>
    %17 = arith.maximumf %15, %16 : vector<16x32xf32>
    %c0_10 = arith.constant 0 : index
    %c0_11 = arith.constant 0 : index
    %18 = vector.load %arg5[%c0_10, %c0_11] : memref<32x16xf32, #tpu.memory_space<vmem>>, vector<32x16xf32>
    %cst_12 = arith.constant dense<0.000000e+00> : vector<16x16xf32>
    %19 = tpu.matmul %17, %18, %cst_12 {dimension_numbers = #tpu.dot_dimension_numbers<[1], [0], [0], [1], [0, 0, 1, 1], [], []>} : vector<16x32xf32>, vector<32x16xf32>, vector<16x16xf32> -> vector<16x16xf32>
    %20 = vector.broadcast %1 : vector<16x1xf32> to vector<16x16xf32>
    %21 = arith.mulf %19, %20 : vector<16x16xf32>
    %22 = arith.truncf %21 : vector<16x16xf32> to vector<16x16xbf16>
    %cst_13 = arith.constant dense<0.000000e+00> : vector<16x16xf32>
    %23 = tpu.matmul %0, %22, %cst_13 {dimension_numbers = #tpu.dot_dimension_numbers<[1], [0], [0], [1], [0, 0, 1, 1], [], []>} : vector<16x16xbf16>, vector<16x16xbf16>, vector<16x16xf32> -> vector<16x16xf32>
    %24 = vector.broadcast %1 : vector<16x1xf32> to vector<16x16xf32>
    %25 = arith.mulf %23, %24 : vector<16x16xf32>
    %c0_14 = arith.constant 0 : index
    %c0_15 = arith.constant 0 : index
    %26 = vector.load %arg6[%c0_14, %c0_15] : memref<1x16xf32, #tpu.memory_space<vmem>>, vector<1x16xf32>
    %27 = vector.broadcast %26 : vector<1x16xf32> to vector<16x16xf32>
    %28 = arith.addf %25, %27 : vector<16x16xf32>
    %cst_16 = arith.constant 0.000000e+00 : f32
    %29 = vector.broadcast %cst_16 : f32 to vector<16x16xf32>
    %30 = arith.maximumf %28, %29 : vector<16x16xf32>
    %c0_17 = arith.constant 0 : index
    %c0_18 = arith.constant 0 : index
    %31 = vector.load %arg7[%c0_17, %c0_18] : memref<16x128xf32, #tpu.memory_space<vmem>>, vector<16x128xf32>
    %cst_19 = arith.constant dense<0.000000e+00> : vector<16x128xf32>
    %32 = tpu.matmul %30, %31, %cst_19 {dimension_numbers = #tpu.dot_dimension_numbers<[1], [0], [0], [1], [0, 0, 1, 1], [], []>} : vector<16x16xf32>, vector<16x128xf32>, vector<16x128xf32> -> vector<16x128xf32>
    %33 = vector.broadcast %1 : vector<16x1xf32> to vector<16x128xf32>
    %34 = arith.mulf %32, %33 : vector<16x128xf32>
    %35 = arith.truncf %34 : vector<16x128xf32> to vector<16x128xbf16>
    %cst_20 = arith.constant dense<0.000000e+00> : vector<16x128xf32>
    %36 = tpu.matmul %0, %35, %cst_20 {dimension_numbers = #tpu.dot_dimension_numbers<[1], [0], [0], [1], [0, 0, 1, 1], [], []>} : vector<16x16xbf16>, vector<16x128xbf16>, vector<16x128xf32> -> vector<16x128xf32>
    %37 = vector.broadcast %1 : vector<16x1xf32> to vector<16x128xf32>
    %38 = arith.mulf %36, %37 : vector<16x128xf32>
    %c0_21 = arith.constant 0 : index
    %c0_22 = arith.constant 0 : index
    %39 = vector.load %arg8[%c0_21, %c0_22] : memref<1x128xf32, #tpu.memory_space<vmem>>, vector<1x128xf32>
    %40 = vector.broadcast %39 : vector<1x128xf32> to vector<16x128xf32>
    %41 = arith.addf %38, %40 : vector<16x128xf32>
    %c0_23 = arith.constant 0 : index
    %c0_24 = arith.constant 0 : index
    %42 = vector.load %arg9[%c0_23, %c0_24] : memref<16x128xf32, #tpu.memory_space<vmem>>, vector<16x128xf32>
    tpu.vector_store %arg9[%c0_23, %c0_24], %41 {strides = array<i32>} : memref<16x128xf32, #tpu.memory_space<vmem>>, vector<16x128xf32>,
    return
  }
}

</mosaic_0001>

<llo_original>
// kernel: tpu_custom_call.1
$region0: #{tpu_custom_call.1}
  #allocation0 [shape = 'u32[]', space=smem, size = 0x4, offset = 0x4, fixed_abs, tag = 'smem constant byte address 0x4 - core index']
  #allocation1 [shape = 'u32[144,128]{1,0:T(1,128)}', space=vmem, size = 0x12000, scoped, tag = 'internal scratch']
  %s0 = inlined_call_operand.vmem [shape: bf16[16,16], index: 0, kind: input, shape index: {}]
  %s1 = inlined_call_operand.vmem [shape: f32[16,1], index: 1, kind: input, shape index: {}]
  %s2 = inlined_call_operand.vmem [shape: f32[16,1], index: 2, kind: input, shape index: {}]
  %s3 = inlined_call_operand.vmem [shape: f32[1,32], index: 3, kind: input, shape index: {}]
  %s4 = inlined_call_operand.vmem [shape: f32[1,32], index: 4, kind: input, shape index: {}]
  %s5 = inlined_call_operand.vmem [shape: f32[32,16], index: 5, kind: input, shape index: {}]
  %s6 = inlined_call_operand.vmem [shape: f32[1,16], index: 6, kind: input, shape index: {}]
  %s7 = inlined_call_operand.vmem [shape: f32[16,128], index: 7, kind: input, shape index: {}]
  %s8 = inlined_call_operand.vmem [shape: f32[1,128], index: 8, kind: input, shape index: {}]
  %s9 = inlined_call_operand.hbm [shape: f32[16,128], index: 9, kind: output, shape index: {}]
  %s10 = sld [smem:[#allocation0]]
  $region46: #{tpu_custom_call.1} parent=0
    _
  %s12 = ssub.s32 1, %s10
  %s13 = scalar_select 0, %s12, %s10
  $region1: #{tpu_custom_call.1} parent=0
    #allocation2 [shape = 'u8[8192]{0}', space=vmem, size = 0x2000, scoped, tag = 'output window, operand 0, single buffered']
    #allocation3 [shape = 's32[1]{0}', space=sflag, size = 0x4, scoped, tag = 'scoped memory for tpu_custom_call.1']
    %14 = vsyncpa [#allocation3], 0
    // Predicated region
    $region2: #{tpu_custom_call.1} parent=1 // pred_check
      _
    $region3: #{tpu_custom_call.1} parent=1 // pred_check_branch
      %16 = sbr.rel (0) target = $region5
    $region4: #{tpu_custom_call.1} parent=1 // pred_region
      _
    $region5: #{tpu_custom_call.1} parent=1 // pred_fallthru
      _
    // Predicated region
    $region6: #{tpu_custom_call.1} parent=1 // pred_check
      _
    $region7: #{tpu_custom_call.1} parent=1 // pred_check_branch
      %18 = sbr.rel (0) target = $region9
    $region8: #{tpu_custom_call.1} parent=1 // pred_region
      _
    $region9: #{tpu_custom_call.1} parent=1 // pred_fallthru
      _
    // Predicated region
    $region10: #{tpu_custom_call.1} parent=1 // pred_check
      _
    $region11: #{tpu_custom_call.1} parent=1 // pred_check_branch
      %20 = sbr.rel (0) target = $region13
    $region12: #{tpu_custom_call.1} parent=1 // pred_region
      _
    $region13: #{tpu_custom_call.1} parent=1 // pred_fallthru
      _
    // Predicated region
    $region14: #{tpu_custom_call.1} parent=1 // pred_check
      _
    $region15: #{tpu_custom_call.1} parent=1 // pred_check_branch
      %22 = sbr.rel (0) target = $region17
    $region16: #{tpu_custom_call.1} parent=1 // pred_region
      _
    $region17: #{tpu_custom_call.1} parent=1 // pred_fallthru
      _
    // Predicated region
    $region18: #{tpu_custom_call.1} parent=1 // pred_check
      _
    $region19: #{tpu_custom_call.1} parent=1 // pred_check_branch
      %24 = sbr.rel (0) target = $region21
    $region20: #{tpu_custom_call.1} parent=1 // pred_region
      _
    $region21: #{tpu_custom_call.1} parent=1 // pred_fallthru
      _
    // Predicated region
    $region22: #{tpu_custom_call.1} parent=1 // pred_check
      _
    $region23: #{tpu_custom_call.1} parent=1 // pred_check_branch
      %26 = sbr.rel (0) target = $region25
    $region24: #{tpu_custom_call.1} parent=1 // pred_region
      _
    $region25: #{tpu_custom_call.1} parent=1 // pred_fallthru
      _
    // Predicated region
    $region26: #{tpu_custom_call.1} parent=1 // pred_check
      _
    $region27: #{tpu_custom_call.1} parent=1 // pred_check_branch
      %28 = sbr.rel (0) target = $region29
    $region28: #{tpu_custom_call.1} parent=1 // pred_region
      _
    $region29: #{tpu_custom_call.1} parent=1 // pred_fallthru
      _
    // Predicated region
    $region30: #{tpu_custom_call.1} parent=1 // pred_check
      _
    $region31: #{tpu_custom_call.1} parent=1 // pred_check_branch
      %30 = sbr.rel (0) target = $region33
    $region32: #{tpu_custom_call.1} parent=1 // pred_region
      _
    $region33: #{tpu_custom_call.1} parent=1 // pred_fallthru
      _
    // Predicated region
    $region34: #{tpu_custom_call.1} parent=1 // pred_check
      _
    $region35: #{tpu_custom_call.1} parent=1 // pred_check_branch
      %32 = sbr.rel (0) target = $region37
    $region36: #{tpu_custom_call.1} parent=1 // pred_region
      _
    $region37: #{tpu_custom_call.1} parent=1 // pred_fallthru
      _
    %v34 = vld [vmem:[%s0] sm:$0xf]
    %v35 = vld [vmem:[%s0 + $0x4] sm:$0xf]
    %v36 = vld [vmem:[%s1] sm:$0xff]
    %v37 = vld [vmem:[%s1 + $0x8] sm:$0xff]
    %v38 = vld [vmem:[%s2] sm:$0xff]
    %v39 = vld [vmem:[%s2 + $0x8] sm:$0xff]
    %v40 = vld [vmem:[%s3] sm:$0x1]
    %42 = vset.pattern.permute.xlu0 0
    %43 = vperm.xlu0 %42, %v38
    %v44 = vpop.permute.xlu0 %43
    %47 = vset.pattern.permute.xlu0 0
    %48 = vperm.xlu0 %47, %v39
    %v49 = vpop.permute.xlu0 %48
    %v52 = vlaneseq
    %v53 = vshrl.u32 %v52, 7
    %v54 = vsub.s32 0, %v53
    %v55 = vrot.slane %v40, %v54
    %v57 = vmul.f32 %v44, %v55
    %v58 = vmul.f32 %v49, %v55
    %60 = vset.pattern.permute.xlu0 0
    %61 = vperm.xlu0 %60, %v36
    %v62 = vpop.permute.xlu0 %61
    %65 = vset.pattern.permute.xlu0 0
    %66 = vperm.xlu0 %65, %v37
    %v67 = vpop.permute.xlu0 %66
    %v69 = vmul.f32 %v57, %v62
    %v70 = vmul.f32 %v58, %v67
    %v71 = vpack.c.bf16 %v70, %v69
    %v74 = vunpack.c.l.b16 %v34
    %v75 = vunpack.c.l.b16 %v35
    %v76 = vpack.c.b16 %v75, %v74
    %vm77 = vcmask 130048
    %v79 = vsel %vm77, %v76, 0
    %81 = vmatprep.subr.bf16.mxu0 0
    %82 = vmatpush1.bf16.msra.mxu0 0
    %83 = vmatprep.subr.bf16.mxu0 0
    %84 = vmatpush1.bf16.msra.mxu0 0
    %85 = vmatprep.subr.bf16.mxu0 0
    %86 = vmatpush1.bf16.msra.mxu0 0
    %87 = vmatprep.subr.bf16.mxu0 0
    %88 = vmatpush1.bf16.msra.mxu0 0
    %89 = vmatprep.subr.bf16.mxu0 0
    %90 = vmatpush1.bf16.msra.mxu0 0
    %91 = vmatprep.subr.bf16.mxu0 0
    %92 = vmatpush1.bf16.msra.mxu0 0
    %93 = vmatprep.subr.bf16.mxu0 0
    %94 = vmatpush1.bf16.msra.mxu0 0
    %95 = vmatprep.subr.bf16.mxu0 0
    %96 = vmatpush1.bf16.msra.mxu0 %v71
    %97 = vmatprep.subr.bf16.mxu0 0
    %98 = vmatpush2.bf16.msra.mxu0 0
    %99 = vmatprep.subr.bf16.mxu0 0
    %100 = vmatpush2.bf16.msra.mxu0 0
    %101 = vmatprep.subr.bf16.mxu0 0
    %102 = vmatpush2.bf16.msra.mxu0 0
    %103 = vmatprep.subr.bf16.mxu0 0
    %104 = vmatpush2.bf16.msra.mxu0 0
    %105 = vmatprep.subr.bf16.mxu0 0
    %106 = vmatpush2.bf16.msra.mxu0 0
    %107 = vmatprep.subr.bf16.mxu0 0
    %108 = vmatpush2.bf16.msra.mxu0 0
    %109 = vmatprep.subr.bf16.mxu0 0
    %110 = vmatpush2.bf16.msra.mxu0 0
    %111 = vmatprep.subr.bf16.mxu0 0
    %112 = vmatpush2.bf16.msra.mxu0 0
    %113 = vmatprep.mubr.bf16.mxu0 0
    %114 = vmatmul.mubr.bf16.gmra.mxu0 %v79
    %v115 = vpop.f32.mrf.mxu0
    %v116 = vadd.f32 0.0, %v115
    %v117 = vpop.f32.mrf.mxu0
    %v118 = vpop.f32.mrf.mxu0
    %v119 = vadd.f32 0.0, %v118
    %v120 = vpop.f32.mrf.mxu0
    %121 = vdwg.mxu0
    %v122 = vmul.f32 %v116, %v62
    %v123 = vmul.f32 %v119, %v67
    %v124 = vld [vmem:[%s4] sm:$0x1]
    %v126 = vlaneseq
    %v127 = vshrl.u32 %v126, 7
    %v128 = vsub.s32 0, %v127
    %v129 = vrot.slane %v124, %v128
    %v131 = vadd.f32 %v122, %v129
    %v132 = vadd.f32 %v123, %v129
    %v133 = vmax.f32 %v131, 0.0
    %v134 = vmax.f32 %v132, 0.0
    %v135 = vld [vmem:[%s5] sm:$0xff]
    %v136 = vld [vmem:[%s5 + $0x8] sm:$0xff]
    %v137 = vld [vmem:[%s5 + $0x10] sm:$0xff]
    %v138 = vld [vmem:[%s5 + $0x18] sm:$0xff]
    %vm139 = vcmask 261120
    %v141 = vsel %vm139, %v133, 0
    %v144 = vsel %vm139, %v134, 0
    %146 = vmatprep.subr.mxu0 0.0
    %147 = vmatpush1.msra.mxu0 0.0
    %148 = vmatprep.subr.mxu0 0.0
    %149 = vmatpush1.msra.mxu0 0.0
    %150 = vmatprep.subr.mxu0 0.0
    %151 = vmatpush1.msra.mxu0 0.0
    %152 = vmatprep.subr.mxu0 0.0
    %153 = vmatpush1.msra.mxu0 0.0
    %154 = vmatprep.subr.mxu0 0.0
    %155 = vmatpush1.msra.mxu0 0.0
    %156 = vmatprep.subr.mxu0 0.0
    %157 = vmatpush1.msra.mxu0 0.0
    %158 = vmatprep.subr.mxu0 0.0
    %159 = vmatpush1.msra.mxu0 0.0
    %160 = vmatprep.subr.mxu0 0.0
    %161 = vmatpush1.msra.mxu0 0.0
    %162 = vmatprep.subr.mxu0 0.0
    %163 = vmatpush1.msra.mxu0 0.0
    %164 = vmatprep.subr.mxu0 0.0
    %165 = vmatpush1.msra.mxu0 0.0
    %166 = vmatprep.subr.mxu0 0.0
    %167 = vmatpush1.msra.mxu0 0.0
    %168 = vmatprep.subr.mxu0 0.0
    %169 = vmatpush1.msra.mxu0 0.0
    %170 = vmatprep.subr.mxu0 0.0
    %171 = vmatpush1.msra.mxu0 %v138
    %172 = vmatprep.subr.mxu0 0.0
    %173 = vmatpush1.msra.mxu0 %v137
    %174 = vmatprep.subr.mxu0 0.0
    %175 = vmatpush1.msra.mxu0 %v136
    %176 = vmatprep.subr.mxu0 0.0
    %177 = vmatpush1.msra.mxu0 %v135
    %178 = vmatprep.subr.mxu0 0.0
    %179 = vmatpush2.msra.mxu0 0.0
    %180 = vmatprep.subr.mxu0 0.0
    %181 = vmatpush2.msra.mxu0 0.0
    %182 = vmatprep.subr.mxu0 0.0
    %183 = vmatpush2.msra.mxu0 0.0
    %184 = vmatprep.subr.mxu0 0.0
    %185 = vmatpush2.msra.mxu0 0.0
    %186 = vmatprep.subr.mxu0 0.0
    %187 = vmatpush2.msra.mxu0 0.0
    %188 = vmatprep.subr.mxu0 0.0
    %189 = vmatpush2.msra.mxu0 0.0
    %190 = vmatprep.subr.mxu0 0.0
    %191 = vmatpush2.msra.mxu0 0.0
    %192 = vmatprep.subr.mxu0 0.0
    %193 = vmatpush2.msra.mxu0 0.0
    %194 = vmatprep.subr.mxu0 0.0
    %195 = vmatpush2.msra.mxu0 0.0
    %196 = vmatprep.subr.mxu0 0.0
    %197 = vmatpush2.msra.mxu0 0.0
    %198 = vmatprep.subr.mxu0 0.0
    %199 = vmatpush2.msra.mxu0 0.0
    %200 = vmatprep.subr.mxu0 0.0
    %201 = vmatpush2.msra.mxu0 0.0
    %202 = vmatprep.subr.mxu0 0.0
    %203 = vmatpush2.msra.mxu0 0.0
    %204 = vmatprep.subr.mxu0 0.0
    %205 = vmatpush2.msra.mxu0 0.0
    %206 = vmatprep.subr.mxu0 0.0
    %207 = vmatpush2.msra.mxu0 0.0
    %208 = vmatprep.subr.mxu0 0.0
    %209 = vmatpush2.msra.mxu0 0.0
    %210 = vmatprep.mubr.f32.mxu0 0.0
    %211 = vmatmul.mubr.f32.gmra.mxu0 %v141
    %v212 = vpop.f32.mrf.mxu0
    %v213 = vadd.f32 0.0, %v212
    %v214 = vpop.f32.mrf.mxu0
    %215 = vmatprep.mubr.f32.mxu0 0.0
    %216 = vmatmul.mubr.f32.gmra.mxu0 %v144
    %v217 = vpop.f32.mrf.mxu0
    %v218 = vadd.f32 0.0, %v217
    %v219 = vpop.f32.mrf.mxu0
    %220 = vdwg.mxu0
    %v221 = vmul.f32 %v213, %v62
    %v222 = vmul.f32 %v218, %v67
    %v223 = vpack.c.bf16 %v222, %v221
    %224 = vmatprep.subr.bf16.mxu0 0
    %225 = vmatpush1.bf16.msra.mxu0 0
    %226 = vmatprep.subr.bf16.mxu0 0
    %227 = vmatpush1.bf16.msra.mxu0 0
    %228 = vmatprep.subr.bf16.mxu0 0
    %229 = vmatpush1.bf16.msra.mxu0 0
    %230 = vmatprep.subr.bf16.mxu0 0
    %231 = vmatpush1.bf16.msra.mxu0 0
    %232 = vmatprep.subr.bf16.mxu0 0
    %233 = vmatpush1.bf16.msra.mxu0 0
    %234 = vmatprep.subr.bf16.mxu0 0
    %235 = vmatpush1.bf16.msra.mxu0 0
    %236 = vmatprep.subr.bf16.mxu0 0
    %237 = vmatpush1.bf16.msra.mxu0 0
    %238 = vmatprep.subr.bf16.mxu0 0
    %239 = vmatpush1.bf16.msra.mxu0 %v223
    %240 = vmatprep.subr.bf16.mxu0 0
    %241 = vmatpush2.bf16.msra.mxu0 0
    %242 = vmatprep.subr.bf16.mxu0 0
    %243 = vmatpush2.bf16.msra.mxu0 0
    %244 = vmatprep.subr.bf16.mxu0 0
    %245 = vmatpush2.bf16.msra.mxu0 0
    %246 = vmatprep.subr.bf16.mxu0 0
    %247 = vmatpush2.bf16.msra.mxu0 0
    %248 = vmatprep.subr.bf16.mxu0 0
    %249 = vmatpush2.bf16.msra.mxu0 0
    %250 = vmatprep.subr.bf16.mxu0 0
    %251 = vmatpush2.bf16.msra.mxu0 0
    %252 = vmatprep.subr.bf16.mxu0 0
    %253 = vmatpush2.bf16.msra.mxu0 0
    %254 = vmatprep.subr.bf16.mxu0 0
    %255 = vmatpush2.bf16.msra.mxu0 0
    %256 = vmatprep.mubr.bf16.mxu0 0
    %257 = vmatmul.mubr.bf16.gmra.mxu0 %v79
    %v258 = vpop.f32.mrf.mxu0
    %v259 = vadd.f32 0.0, %v258
    %v260 = vpop.f32.mrf.mxu0
    %v261 = vpop.f32.mrf.mxu0
    %v262 = vadd.f32 0.0, %v261
    %v263 = vpop.f32.mrf.mxu0
    %264 = vdwg.mxu0
    %v265 = vmul.f32 %v259, %v62
    %v266 = vmul.f32 %v262, %v67
    %v267 = vld [vmem:[%s6] sm:$0x1]
    %v269 = vlaneseq
    %v270 = vshrl.u32 %v269, 7
    %v271 = vsub.s32 0, %v270
    %v272 = vrot.slane %v267, %v271
    %v274 = vadd.f32 %v265, %v272
    %v275 = vadd.f32 %v266, %v272
    %v276 = vmax.f32 %v274, 0.0
    %v277 = vmax.f32 %v275, 0.0
    %v278 = vld [vmem:[%s7] sm:$0xff]
    %v279 = vld [vmem:[%s7 + $0x8] sm:$0xff]
    %v281 = vsel %vm77, %v276, 0
    %v284 = vsel %vm77, %v277, 0
    %286 = vmatprep.subr.mxu0 0.0
    %287 = vmatpush1.msra.mxu0 0.0
    %288 = vmatprep.subr.mxu0 0.0
    %289 = vmatpush1.msra.mxu0 0.0
    %290 = vmatprep.subr.mxu0 0.0
    %291 = vmatpush1.msra.mxu0 0.0
    %292 = vmatprep.subr.mxu0 0.0
    %293 = vmatpush1.msra.mxu0 0.0
    %294 = vmatprep.subr.mxu0 0.0
    %295 = vmatpush1.msra.mxu0 0.0
    %296 = vmatprep.subr.mxu0 0.0
    %297 = vmatpush1.msra.mxu0 0.0
    %298 = vmatprep.subr.mxu0 0.0
    %299 = vmatpush1.msra.mxu0 0.0
    %300 = vmatprep.subr.mxu0 0.0
    %301 = vmatpush1.msra.mxu0 0.0
    %302 = vmatprep.subr.mxu0 0.0
    %303 = vmatpush1.msra.mxu0 0.0
    %304 = vmatprep.subr.mxu0 0.0
    %305 = vmatpush1.msra.mxu0 0.0
    %306 = vmatprep.subr.mxu0 0.0
    %307 = vmatpush1.msra.mxu0 0.0
    %308 = vmatprep.subr.mxu0 0.0
    %309 = vmatpush1.msra.mxu0 0.0
    %310 = vmatprep.subr.mxu0 0.0
    %311 = vmatpush1.msra.mxu0 0.0
    %312 = vmatprep.subr.mxu0 0.0
    %313 = vmatpush1.msra.mxu0 0.0
    %314 = vmatprep.subr.mxu0 0.0
    %315 = vmatpush1.msra.mxu0 %v279
    %316 = vmatprep.subr.mxu0 0.0
    %317 = vmatpush1.msra.mxu0 %v278
    %318 = vmatprep.subr.mxu0 0.0
    %319 = vmatpush2.msra.mxu0 0.0
    %320 = vmatprep.subr.mxu0 0.0
    %321 = vmatpush2.msra.mxu0 0.0
    %322 = vmatprep.subr.mxu0 0.0
    %323 = vmatpush2.msra.mxu0 0.0
    %324 = vmatprep.subr.mxu0 0.0
    %325 = vmatpush2.msra.mxu0 0.0
    %326 = vmatprep.subr.mxu0 0.0
    %327 = vmatpush2.msra.mxu0 0.0
    %328 = vmatprep.subr.mxu0 0.0
    %329 = vmatpush2.msra.mxu0 0.0
    %330 = vmatprep.subr.mxu0 0.0
    %331 = vmatpush2.msra.mxu0 0.0
    %332 = vmatprep.subr.mxu0 0.0
    %333 = vmatpush2.msra.mxu0 0.0
    %334 = vmatprep.subr.mxu0 0.0
    %335 = vmatpush2.msra.mxu0 0.0
    %336 = vmatprep.subr.mxu0 0.0
    %337 = vmatpush2.msra.mxu0 0.0
    %338 = vmatprep.subr.mxu0 0.0
    %339 = vmatpush2.msra.mxu0 0.0
    %340 = vmatprep.subr.mxu0 0.0
    %341 = vmatpush2.msra.mxu0 0.0
    %342 = vmatprep.subr.mxu0 0.0
    %343 = vmatpush2.msra.mxu0 0.0
    %344 = vmatprep.subr.mxu0 0.0
    %345 = vmatpush2.msra.mxu0 0.0
    %346 = vmatprep.subr.mxu0 0.0
    %347 = vmatpush2.msra.mxu0 0.0
    %348 = vmatprep.subr.mxu0 0.0
    %349 = vmatpush2.msra.mxu0 0.0
    %350 = vmatprep.mubr.f32.mxu0 0.0
    %351 = vmatmul.mubr.f32.gmra.mxu0 %v281
    %v352 = vpop.f32.mrf.mxu0
    %v353 = vadd.f32 0.0, %v352
    %v354 = vpop.f32.mrf.mxu0
    %355 = vmatprep.mubr.f32.mxu0 0.0
    %356 = vmatmul.mubr.f32.gmra.mxu0 %v284
    %v357 = vpop.f32.mrf.mxu0
    %v358 = vadd.f32 0.0, %v357
    %v359 = vpop.f32.mrf.mxu0
    %360 = vdwg.mxu0
    %v361 = vmul.f32 %v353, %v62
    %v362 = vmul.f32 %v358, %v67
    %v363 = vpack.c.bf16 %v362, %v361
    %364 = vmatprep.subr.bf16.mxu0 0
    %365 = vmatpush1.bf16.msra.mxu0 0
    %366 = vmatprep.subr.bf16.mxu0 0
    %367 = vmatpush1.bf16.msra.mxu0 0
    %368 = vmatprep.subr.bf16.mxu0 0
    %369 = vmatpush1.bf16.msra.mxu0 0
    %370 = vmatprep.subr.bf16.mxu0 0
    %371 = vmatpush1.bf16.msra.mxu0 0
    %372 = vmatprep.subr.bf16.mxu0 0
    %373 = vmatpush1.bf16.msra.mxu0 0
    %374 = vmatprep.subr.bf16.mxu0 0
    %375 = vmatpush1.bf16.msra.mxu0 0
    %376 = vmatprep.subr.bf16.mxu0 0
    %377 = vmatpush1.bf16.msra.mxu0 0
    %378 = vmatprep.subr.bf16.mxu0 0
    %379 = vmatpush1.bf16.msra.mxu0 %v363
    %380 = vmatprep.subr.bf16.mxu0 0
    %381 = vmatpush2.bf16.msra.mxu0 0
    %382 = vmatprep.subr.bf16.mxu0 0
    %383 = vmatpush2.bf16.msra.mxu0 0
    %384 = vmatprep.subr.bf16.mxu0 0
    %385 = vmatpush2.bf16.msra.mxu0 0
    %386 = vmatprep.subr.bf16.mxu0 0
    %387 = vmatpush2.bf16.msra.mxu0 0
    %388 = vmatprep.subr.bf16.mxu0 0
    %389 = vmatpush2.bf16.msra.mxu0 0
    %390 = vmatprep.subr.bf16.mxu0 0
    %391 = vmatpush2.bf16.msra.mxu0 0
    %392 = vmatprep.subr.bf16.mxu0 0
    %393 = vmatpush2.bf16.msra.mxu0 0
    %394 = vmatprep.subr.bf16.mxu0 0
    %395 = vmatpush2.bf16.msra.mxu0 0
    %396 = vmatprep.mubr.bf16.mxu0 0
    %397 = vmatmul.mubr.bf16.gmra.mxu0 %v79
    %v398 = vpop.f32.mrf.mxu0
    %v399 = vadd.f32 0.0, %v398
    %v400 = vpop.f32.mrf.mxu0
    %v401 = vpop.f32.mrf.mxu0
    %v402 = vadd.f32 0.0, %v401
    %v403 = vpop.f32.mrf.mxu0
    %404 = vdwg.mxu0
    %v405 = vmul.f32 %v399, %v62
    %v406 = vmul.f32 %v402, %v67
    %v407 = vld [vmem:[%s8] sm:$0x1]
    %v409 = vlaneseq
    %v410 = vshrl.u32 %v409, 7
    %v411 = vsub.s32 0, %v410
    %v412 = vrot.slane %v407, %v411
    %v414 = vadd.f32 %v405, %v412
    %v415 = vadd.f32 %v406, %v412
    %416 = vst [vmem:[#allocation2] sm:$0xff] %v414
    %417 = vst [vmem:[#allocation2 + $0x8] sm:$0xff] %v415
    // Predicated region
    $region38: #{tpu_custom_call.1} parent=1 // pred_check
      _
    $region39: #{tpu_custom_call.1} parent=1 // pred_check_branch
      %419 = sbr.rel (0) target = $region41
    $region40: #{tpu_custom_call.1} parent=1 // pred_region
      %s421 = ssub.s32 256, 256
      %422 = vsyncadd [#allocation3], %s421
      %s423 = sshll.u32 [#allocation2], 4
      %s424 = int_to_ptr.vmem [resolvable:$true] %s423
      %429 = dma.vmem_to_hbm [thread:$0]  %s424, 256, %s9, [#allocation3], 128, 128, 8
    $region41: #{tpu_custom_call.1} parent=1 // pred_fallthru
      _
    // Predicated region
    $region42: #{tpu_custom_call.1} parent=1 // pred_check
      _
    $region43: #{tpu_custom_call.1} parent=1 // pred_check_branch
      %431 = sbr.rel (0) target = $region45
    $region44: #{tpu_custom_call.1} parent=1 // pred_region
      %432 = dma.done [#allocation3], 256
    $region45: #{tpu_custom_call.1} parent=1 // pred_fallthru
      _
    %433 = vsyncpa [#allocation3], 1

</llo_original>
